<compile_context>
chip_gen: v7x
topology: tpu7x:2x2x1
jax: 0.10.0
libtpu: 0.0.40
codegen_flags: <defaults>
</compile_context>

<pallas_src>
import functools
import math

import jax
import jax.numpy as jnp
from jax.experimental import pallas as pl
from jax.experimental.pallas import tpu as pltpu


# ----------------------------------------------------------------------------
# small helpers
# ----------------------------------------------------------------------------
def _round_up(n, m):
    return ((n + m - 1) // m) * m


def _largest_divisor_leq(n, cap):
    cap = max(1, min(n, cap))
    for d in range(cap, 0, -1):
        if n % d == 0:
            return d
    return 1


def _vmem_capacity_bytes():
    """Per-TensorCore VMEM capacity; conservative v7x fallback (64 MiB)."""
    try:
        info = pltpu.get_tpu_info()
        cap = int(getattr(info, "vmem_capacity_bytes", 0))
        return cap if cap > 0 else (64 << 20)
    except Exception:
        return 64 << 20


def _vmem_footprint(bb, bq, nx, cp, chp, cv, in_item, out_item):
    """Rough per-grid-step VMEM working set (bytes), incl. compiler temporaries."""
    io = 2 * bb * bq * cp * in_item          # y block (double buffered)
    io += 2 * bb * nx * cp * in_item         # x block (double buffered)
    io += 2 * bb * bq * cv * out_item        # out block (double buffered)
    w = 2 * (cp * chp + cp * (chp + cv)) * in_item + 2 * (2 * chp + cv) * 4
    scratch = bb * nx * (chp + cv) * in_item                      # cached K / V
    # compiler-managed f32 temporaries: q, kv, dots/e/attn (~2 live), out
    temps = 4 * (bb * bq * chp + bb * nx * (chp + cv)
                 + 2 * bb * bq * nx + bb * bq * cv)
    return io + w + scratch + temps


def _select_blocks(B, Ny_p, Nx, Cp, Chp, Cv, in_item, out_item, vmem_budget,
                   block_b=None, block_q=None):
    if block_q is None:
        # multiple of 8 dividing the (8-padded) query length, up to 512 rows
        block_q = 8 * _largest_divisor_leq(Ny_p // 8, 512 // 8)
    if block_b is None:
        # cap the batched-einsum unroll and keep <= ~1024 rows per MXU pass
        bb_cap = max(1, min(8, 1024 // max(block_q, 1)))
        block_b = _largest_divisor_leq(B, bb_cap)
    # v7x two-TensorCore split: keep >= 2 steps on the (parallel) batch axis
    # when there is enough total work for it to matter.
    if B // block_b == 1 and block_b > 1 and block_b * Ny_p >= 512:
        block_b = _largest_divisor_leq(B, max(1, block_b // 2))
    # Shrink until the working set fits the VMEM budget (query tile first).
    while _vmem_footprint(block_b, block_q, Nx, Cp, Chp, Cv,
                          in_item, out_item) > vmem_budget:
        if block_q > 8:
            block_q = 8 * _largest_divisor_leq(Ny_p // 8,
                                               max(1, (block_q // 8) // 2))
        elif block_b > 1:
            block_b = _largest_divisor_leq(B, max(1, block_b // 2))
        else:
            # TODO(synk): add a third grid axis over Nx with flash-style
            # online-softmax accumulators for very long key/value sequences.
            break
    return block_b, block_q


# ----------------------------------------------------------------------------
# kernel
# ----------------------------------------------------------------------------
def _cross_attn_kernel(y_ref, x_ref, wq_ref, bq_ref, wkv_ref, bkv_ref, o_ref,
                       k_scr, v_scr, *, chp, exact_softmax):
    bb, tq, cp = y_ref.shape
    _, nx, _ = x_ref.shape
    cv = o_ref.shape[-1]
    cdt = y_ref.dtype  # compute dtype (bf16 or f32)

    # --- K|V projection: once per batch block, cached in VMEM scratch -------
    @pl.when(pl.program_id(1) == 0)
    def _():
        xf = x_ref[...].reshape(bb * nx, cp)                       # (bb*nx, Cp)
        kv = jnp.dot(xf, wkv_ref[...],
                     preferred_element_type=jnp.float32) + bkv_ref[...]
        k_scr[...] = kv[:, :chp].reshape(bb, nx, chp).astype(k_scr.dtype)
        v_scr[...] = kv[:, chp:].reshape(bb, nx, cv).astype(v_scr.dtype)

    # --- Q projection (softmax scale already folded into wq / bq) -----------
    yf = y_ref[...].reshape(bb * tq, cp)                           # (bb*tq, Cp)
    q = jnp.dot(yf, wq_ref[...],
                preferred_element_type=jnp.float32) + bq_ref[...]
    q = q.reshape(bb, tq, chp).astype(cdt)

    # --- scores: contract last dims directly (no k.T / XLU transpose) -------
    dots = jnp.einsum("bqd,bkd->bqk", q, k_scr[...],
                      preferred_element_type=jnp.float32)

    # --- numerically stable softmax in f32 ----------------------------------
    m = jnp.max(dots, axis=-1, keepdims=True)
    e = jnp.exp(dots - m)
    s = jnp.sum(e, axis=-1, keepdims=True)
    if exact_softmax:
        attn = e / s                                   # f32 verification path
    else:
        attn = e * pl.reciprocal(s, approx=True)       # EUP slot, bf16 path

    # --- PV matmul (f32 MXU accumulation) ------------------------------------
    out = jnp.einsum("bqk,bkd->bqd", attn.astype(cdt), v_scr[...],
                     preferred_element_type=jnp.float32)
    o_ref[...] = out.astype(o_ref.dtype)


# ----------------------------------------------------------------------------
# wrapper
# ----------------------------------------------------------------------------
def prepare_weights(params, *, compute_dtype=jnp.bfloat16):
    """Hoisted, cacheable weight prep: transpose, fold the softmax scale into
    Q, fuse K|V into one wide matmul, zero-pad the contraction dim to 128."""
    Ch, C = params["wq"].shape
    scale = float(Ch) ** (-0.5)
    Cp = _round_up(C, 128)     # padded contraction dim (lane-dense inputs)
    Chp = _round_up(Ch, 128)   # padded Q/K head dim
    Cv = C                     # V / output width kept un-padded (fewer HBM bytes)

    wq_t = jnp.zeros((Cp, Chp), jnp.float32)
    wq_t = wq_t.at[:C, :Ch].set(params["wq"].T * scale).astype(compute_dtype)
    bq_p = jnp.zeros((1, Chp), jnp.float32).at[0, :Ch].set(params["bq"] * scale)

    wkv_t = jnp.zeros((Cp, Chp + Cv), jnp.float32)
    wkv_t = wkv_t.at[:C, :Ch].set(params["wk"].T)
    wkv_t = wkv_t.at[:C, Chp:Chp + C].set(params["wv"].T)
    wkv_t = wkv_t.astype(compute_dtype)
    bkv_p = jnp.zeros((1, Chp + Cv), jnp.float32)
    bkv_p = bkv_p.at[0, :Ch].set(params["bk"])
    bkv_p = bkv_p.at[0, Chp:Chp + C].set(params["bv"])

    return dict(wq=wq_t, bq=bq_p, wkv=wkv_t, bkv=bkv_p,
                C=C, Ch=Ch, Cp=Cp, Chp=Chp, Cv=Cv, compute_dtype=compute_dtype)


def cross_attn(y, x, prep, *, block_b=None, block_q=None, out_dtype=None):
    """y: (B, Ny, C), x: (B, Nx, C) -> (B, Ny, C).  Matches CrossAttn.forward."""
    B, Ny, C = y.shape
    _, Nx, _ = x.shape
    assert C == prep["C"], "channel dim mismatch with prepared weights"
    cdt = prep["compute_dtype"]
    Cp, Chp, Cv = prep["Cp"], prep["Chp"], prep["Cv"]
    out_dtype = y.dtype if out_dtype is None else out_dtype
    exact_softmax = bool(jnp.dtype(cdt) == jnp.dtype(jnp.float32))

    # Pad the query axis up to a sublane multiple so block_q % 8 == 0 and the
    # in-kernel flatten is layout-free (padded query rows are sliced off).
    Ny_p = _round_up(Ny, 8)

    in_item = jnp.dtype(cdt).itemsize
    out_item = jnp.dtype(out_dtype).itemsize
    vmem_cap = _vmem_capacity_bytes()
    vmem_budget = int(vmem_cap * 0.70)      # headroom for compiler temporaries
    block_b, block_q = _select_blocks(B, Ny_p, Nx, Cp, Chp, Cv, in_item,
                                      out_item, vmem_budget, block_b, block_q)
    footprint = _vmem_footprint(block_b, block_q, Nx, Cp, Chp, Cv,
                                in_item, out_item)
    vmem_limit = int(min(max(2 * footprint + (8 << 20), 32 << 20),
                         int(vmem_cap * 0.90)))

    # Lane-dense (channel-padded) inputs.
    # TODO(synk): for tiny C on bandwidth-bound v5e, benchmark an un-padded
    # channel variant of y/x (full-dim last-axis blocks) against this one.
    y_p = jnp.pad(y.astype(cdt), ((0, 0), (0, Ny_p - Ny), (0, Cp - C)))
    x_p = jnp.pad(x.astype(cdt), ((0, 0), (0, 0), (0, Cp - C)))

    # Advisory cost estimate (KV projection counted once per batch, not per tile).
    flops = 2 * B * (Ny_p * Cp * Chp + Nx * Cp * (Chp + Cv)
                     + Ny_p * Nx * Chp + Ny_p * Nx * Cv)
    transcendentals = B * Ny_p * Nx
    bytes_accessed = ((y_p.size + x_p.size + prep["wq"].size
                       + prep["wkv"].size) * in_item
                      + (prep["bq"].size + prep["bkv"].size) * 4
                      + B * Ny_p * Cv * out_item)

    kernel = functools.partial(_cross_attn_kernel, chp=Chp,
                               exact_softmax=exact_softmax)

    out_p = pl.pallas_call(
        kernel,
        out_shape=jax.ShapeDtypeStruct((B, Ny_p, Cv), out_dtype),
        grid_spec=pltpu.PrefetchScalarGridSpec(
            num_scalar_prefetch=0,
            grid=(B // block_b, Ny_p // block_q),
            in_specs=[
                pl.BlockSpec((block_b, block_q, Cp), lambda b, q: (b, q, 0)),  # y
                pl.BlockSpec((block_b, Nx, Cp), lambda b, q: (b, 0, 0)),       # x (reused over q)
                pl.BlockSpec((Cp, Chp), lambda b, q: (0, 0)),                  # wq (scale folded)
                pl.BlockSpec((1, Chp), lambda b, q: (0, 0)),                   # bq (scale folded)
                pl.BlockSpec((Cp, Chp + Cv), lambda b, q: (0, 0)),             # wk|wv fused
                pl.BlockSpec((1, Chp + Cv), lambda b, q: (0, 0)),              # bk|bv fused
            ],
            out_specs=pl.BlockSpec((block_b, block_q, Cv), lambda b, q: (b, q, 0)),
            scratch_shapes=[
                pltpu.VMEM((block_b, Nx, Chp), cdt),   # cached K (per batch block)
                pltpu.VMEM((block_b, Nx, Cv), cdt),    # cached V (per batch block)
            ],
        ),
        compiler_params=pltpu.CompilerParams(
            # batch axis parallel (v7x 2-TC sharding); query axis arbitrary so
            # the K/V scratch carries across query tiles of one batch block.
            dimension_semantics=("parallel", "arbitrary"),
            vmem_limit_bytes=vmem_limit,
        ),
        cost_estimate=pl.CostEstimate(
            flops=flops, transcendentals=transcendentals,
            bytes_accessed=bytes_accessed),
    )(y_p, x_p, prep["wq"], prep["bq"], prep["wkv"], prep["bkv"])

    return out_p if Ny_p == Ny else out_p[:, :Ny, :]


# ----------------------------------------------------------------------------
# synthetic init + pure-JAX reference (mirrors the PyTorch module)
# ----------------------------------------------------------------------------
def init_params(key, in_channels):
    C = in_channels
    Ch = C // 2
    k = jax.random.split(key, 6)
    # PyTorch stores nn.Linear weight as (out, in).
    wq = jax.random.normal(k[0], (Ch, C), jnp.float32) * math.sqrt(2.0 / Ch)
    wk = jax.random.normal(k[1], (Ch, C), jnp.float32) * math.sqrt(2.0 / Ch)
    wv = jax.random.normal(k[2], (C, C), jnp.float32) * math.sqrt(2.0 / C)
    bound = 1.0 / math.sqrt(C)   # default nn.Linear bias init range
    bq = jax.random.uniform(k[3], (Ch,), jnp.float32, -bound, bound)
    bk = jax.random.uniform(k[4], (Ch,), jnp.float32, -bound, bound)
    bv = jax.random.uniform(k[5], (C,), jnp.float32, -bound, bound)
    return dict(wq=wq, bq=bq, wk=wk, bk=bk, wv=wv, bv=bv)


def cross_attn_ref(y, x, params):
    Ch = params["wq"].shape[0]
    q = y @ params["wq"].T + params["bq"]
    k = x @ params["wk"].T + params["bk"]
    v = x @ params["wv"].T + params["bv"]
    dots = jnp.einsum("bqd,bkd->bqk", q, k) * (Ch ** -0.5)
    attn = jax.nn.softmax(dots, axis=-1)
    return jnp.einsum("bqk,bkd->bqd", attn, v)


if __name__ == "__main__":
    B, Ny, Nx, C = 2, 8, 8, 32
    key = jax.random.PRNGKey(0)
    ky, kx, kp = jax.random.split(key, 3)
    y = jax.random.normal(ky, (B, Ny, C), jnp.float32)
    x = jax.random.normal(kx, (B, Nx, C), jnp.float32)
    params = init_params(kp, C)

    ref = cross_attn_ref(y, x, params)

    # f32 compute path (exact softmax division): tight check vs reference.
    prep_f32 = prepare_weights(params, compute_dtype=jnp.float32)
    out_f32 = jax.block_until_ready(cross_attn(y, x, prep_f32))
    assert out_f32.shape == (B, Ny, C)
    assert jnp.allclose(out_f32, ref, atol=2e-3, rtol=2e-3), "f32 mismatch vs reference"

    # bf16 MXU-input path (recommended on v5e/v6e/v7x): looser tolerance.
    prep_bf16 = prepare_weights(params, compute_dtype=jnp.bfloat16)
    out_bf16 = jax.block_until_ready(cross_attn(y, x, prep_bf16))
    assert out_bf16.shape == (B, Ny, C)
    assert jnp.allclose(out_bf16, ref, atol=0.25, rtol=0.05), "bf16 mismatch vs reference"

    print("KERNEL_OK")
</pallas_src>

<mosaic_0001>
module attributes {stable_mosaic.version = 11 : i64} {
  func.func @_cross_attn_kernel(%arg0: i32, %arg1: i32, %arg2: memref<2x8x128xf32, #tpu.memory_space<vmem>>, %arg3: memref<2x8x128xf32, #tpu.memory_space<vmem>>, %arg4: memref<128x128xf32, #tpu.memory_space<vmem>>, %arg5: memref<1x128xf32, #tpu.memory_space<vmem>>, %arg6: memref<128x160xf32, #tpu.memory_space<vmem>>, %arg7: memref<1x160xf32, #tpu.memory_space<vmem>>, %arg8: memref<2x8x32xf32, #tpu.memory_space<vmem>>, %arg9: memref<2x8x128xf32, #tpu.memory_space<vmem>>, %arg10: memref<2x8x32xf32, #tpu.memory_space<vmem>>) attributes {dimension_semantics = [#tpu.dimension_semantics<parallel>, #tpu.dimension_semantics<arbitrary>], iteration_bounds = array<i64: 1, 1>, scalar_prefetch = 0 : i64, scratch_operands = 2 : i64, tpu.core_type = #tpu.core_type<tc>, window_params = [{transform_indices = @transform_0, window_bounds = array<i64: 2, 8, 128>}, {transform_indices = @transform_1, window_bounds = array<i64: 2, 8, 128>}, {pipeline_mode = #tpu.pipeline_mode<synchronous>, transform_indices = @transform_2, window_bounds = array<i64: 128, 128>}, {pipeline_mode = #tpu.pipeline_mode<synchronous>, transform_indices = @transform_3, window_bounds = array<i64: 1, 128>}, {pipeline_mode = #tpu.pipeline_mode<synchronous>, transform_indices = @transform_4, window_bounds = array<i64: 128, 160>}, {pipeline_mode = #tpu.pipeline_mode<synchronous>, transform_indices = @transform_5, window_bounds = array<i64: 1, 160>}, {transform_indices = @transform_6, window_bounds = array<i64: 2, 8, 32>}]} {
    %c0_i32 = arith.constant 0 : i32
    %0 = arith.cmpi eq, %arg1, %c0_i32 : i32
    %1 = arith.extui %0 : i1 to i32
    %c0_i32_0 = arith.constant 0 : i32
    %2 = arith.cmpi ne, %1, %c0_i32_0 : i32
    scf.if %2 {
      %c0_20 = arith.constant 0 : index
      %c0_21 = arith.constant 0 : index
      %c0_22 = arith.constant 0 : index
      %25 = vector.load %arg3[%c0_20, %c0_21, %c0_22] : memref<2x8x128xf32, #tpu.memory_space<vmem>>, vector<2x8x128xf32>
      %26 = vector.shape_cast %25 : vector<2x8x128xf32> to vector<16x128xf32>
      %c0_23 = arith.constant 0 : index
      %c0_24 = arith.constant 0 : index
      %27 = vector.load %arg6[%c0_23, %c0_24] : memref<128x160xf32, #tpu.memory_space<vmem>>, vector<128x160xf32>
      %cst_25 = arith.constant dense<0.000000e+00> : vector<16x160xf32>
      %28 = tpu.matmul %26, %27, %cst_25 {dimension_numbers = #tpu.dot_dimension_numbers<[1], [0], [0], [1], [0, 0, 1, 1], [], []>} : vector<16x128xf32>, vector<128x160xf32>, vector<16x160xf32> -> vector<16x160xf32>
      %c0_26 = arith.constant 0 : index
      %c0_27 = arith.constant 0 : index
      %29 = vector.load %arg7[%c0_26, %c0_27] : memref<1x160xf32, #tpu.memory_space<vmem>>, vector<1x160xf32>
      %30 = vector.broadcast %29 : vector<1x160xf32> to vector<16x160xf32>
      %31 = arith.addf %28, %30 : vector<16x160xf32>
      %32 = vector.extract_strided_slice %31 {offsets = [0, 0], sizes = [16, 128], strides = [1, 1]} : vector<16x160xf32> to vector<16x128xf32>
      %33 = vector.shape_cast %32 : vector<16x128xf32> to vector<2x8x128xf32>
      %c0_28 = arith.constant 0 : index
      %c0_29 = arith.constant 0 : index
      %c0_30 = arith.constant 0 : index
      %34 = vector.load %arg9[%c0_28, %c0_29, %c0_30] : memref<2x8x128xf32, #tpu.memory_space<vmem>>, vector<2x8x128xf32>
      tpu.vector_store %arg9[%c0_28, %c0_29, %c0_30], %33 {strides = array<i32>} : memref<2x8x128xf32, #tpu.memory_space<vmem>>, vector<2x8x128xf32>,
      %35 = vector.extract_strided_slice %31 {offsets = [0, 128], sizes = [16, 32], strides = [1, 1]} : vector<16x160xf32> to vector<16x32xf32>
      %36 = vector.shape_cast %35 : vector<16x32xf32> to vector<2x8x32xf32>
      %c0_31 = arith.constant 0 : index
      %c0_32 = arith.constant 0 : index
      %c0_33 = arith.constant 0 : index
      %37 = vector.load %arg10[%c0_31, %c0_32, %c0_33] : memref<2x8x32xf32, #tpu.memory_space<vmem>>, vector<2x8x32xf32>
      tpu.vector_store %arg10[%c0_31, %c0_32, %c0_33], %36 {strides = array<i32>} : memref<2x8x32xf32, #tpu.memory_space<vmem>>, vector<2x8x32xf32>,
    } else {
    }
    %c0 = arith.constant 0 : index
    %c0_1 = arith.constant 0 : index
    %c0_2 = arith.constant 0 : index
    %3 = vector.load %arg2[%c0, %c0_1, %c0_2] : memref<2x8x128xf32, #tpu.memory_space<vmem>>, vector<2x8x128xf32>
    %4 = vector.shape_cast %3 : vector<2x8x128xf32> to vector<16x128xf32>
    %c0_3 = arith.constant 0 : index
    %c0_4 = arith.constant 0 : index
    %5 = vector.load %arg4[%c0_3, %c0_4] : memref<128x128xf32, #tpu.memory_space<vmem>>, vector<128x128xf32>
    %cst = arith.constant dense<0.000000e+00> : vector<16x128xf32>
    %6 = tpu.matmul %4, %5, %cst {dimension_numbers = #tpu.dot_dimension_numbers<[1], [0], [0], [1], [0, 0, 1, 1], [], []>} : vector<16x128xf32>, vector<128x128xf32>, vector<16x128xf32> -> vector<16x128xf32>
    %c0_5 = arith.constant 0 : index
    %c0_6 = arith.constant 0 : index
    %7 = vector.load %arg5[%c0_5, %c0_6] : memref<1x128xf32, #tpu.memory_space<vmem>>, vector<1x128xf32>
    %8 = vector.broadcast %7 : vector<1x128xf32> to vector<16x128xf32>
    %9 = arith.addf %6, %8 : vector<16x128xf32>
    %10 = vector.shape_cast %9 : vector<16x128xf32> to vector<2x8x128xf32>
    %c0_7 = arith.constant 0 : index
    %c0_8 = arith.constant 0 : index
    %c0_9 = arith.constant 0 : index
    %11 = vector.load %arg9[%c0_7, %c0_8, %c0_9] : memref<2x8x128xf32, #tpu.memory_space<vmem>>, vector<2x8x128xf32>
    "tpu.trace_start"() <{level = 10 : i32, message = "bqd,bkd->bqk"}> : () -> ()
    %cst_10 = arith.constant dense<0.000000e+00> : vector<2x8x8xf32>
    %12 = tpu.matmul %10, %11, %cst_10 {dimension_numbers = #tpu.dot_dimension_numbers<[2], [2], [1], [1], [0, 0, 0, 1, 1, 1], [0], [0]>} : vector<2x8x128xf32>, vector<2x8x128xf32>, vector<2x8x8xf32> -> vector<2x8x8xf32>
    "tpu.trace_stop"() : () -> ()
    %cst_11 = arith.constant dense<0xFF800000> : vector<2x8xf32>
    %13 = vector.multi_reduction <maximumf>, %12, %cst_11 [2] : vector<2x8x8xf32> to vector<2x8xf32>
    %14 = vector.shape_cast %13 : vector<2x8xf32> to vector<2x8x1xf32>
    %15 = vector.broadcast %14 : vector<2x8x1xf32> to vector<2x8x8xf32>
    %16 = arith.subf %12, %15 : vector<2x8x8xf32>
    %17 = math.exp %16 : vector<2x8x8xf32>
    %cst_12 = arith.constant dense<0.000000e+00> : vector<2x8xf32>
    %18 = vector.multi_reduction <add>, %17, %cst_12 [2] : vector<2x8x8xf32> to vector<2x8xf32>
    %19 = vector.shape_cast %18 : vector<2x8xf32> to vector<2x8x1xf32>
    %20 = vector.broadcast %19 : vector<2x8x1xf32> to vector<2x8x8xf32>
    %21 = arith.divf %17, %20 : vector<2x8x8xf32>
    %c0_13 = arith.constant 0 : index
    %c0_14 = arith.constant 0 : index
    %c0_15 = arith.constant 0 : index
    %22 = vector.load %arg10[%c0_13, %c0_14, %c0_15] : memref<2x8x32xf32, #tpu.memory_space<vmem>>, vector<2x8x32xf32>
    "tpu.trace_start"() <{level = 10 : i32, message = "bqk,bkd->bqd"}> : () -> ()
    %cst_16 = arith.constant dense<0.000000e+00> : vector<2x8x32xf32>
    %23 = tpu.matmul %21, %22, %cst_16 {dimension_numbers = #tpu.dot_dimension_numbers<[2], [1], [1], [2], [0, 0, 0, 1, 1, 2], [0], [0]>} : vector<2x8x8xf32>, vector<2x8x32xf32>, vector<2x8x32xf32> -> vector<2x8x32xf32>
    "tpu.trace_stop"() : () -> ()
    %c0_17 = arith.constant 0 : index
    %c0_18 = arith.constant 0 : index
    %c0_19 = arith.constant 0 : index
    %24 = vector.load %arg8[%c0_17, %c0_18, %c0_19] : memref<2x8x32xf32, #tpu.memory_space<vmem>>, vector<2x8x32xf32>
    tpu.vector_store %arg8[%c0_17, %c0_18, %c0_19], %23 {strides = array<i32>} : memref<2x8x32xf32, #tpu.memory_space<vmem>>, vector<2x8x32xf32>,
    return
  }
  func.func @transform_0(%arg0: i32, %arg1: i32) -> (i32, i32, i32) {
    %c0_i32 = arith.constant 0 : i32
    %c0_i32_0 = arith.constant 0 : i32
    return %arg0, %arg1, %c0_i32 : i32, i32, i32
  }
  func.func @transform_1(%arg0: i32, %arg1: i32) -> (i32, i32, i32) {
    %c0_i32 = arith.constant 0 : i32
    %c0_i32_0 = arith.constant 0 : i32
    %c0_i32_1 = arith.constant 0 : i32
    return %arg0, %c0_i32, %c0_i32_0 : i32, i32, i32
  }
  func.func @transform_2(%arg0: i32, %arg1: i32) -> (i32, i32) {
    %c0_i32 = arith.constant 0 : i32
    %c0_i32_0 = arith.constant 0 : i32
    %c0_i32_1 = arith.constant 0 : i32
    return %c0_i32, %c0_i32_0 : i32, i32
  }
  func.func @transform_3(%arg0: i32, %arg1: i32) -> (i32, i32) {
    %c0_i32 = arith.constant 0 : i32
    %c0_i32_0 = arith.constant 0 : i32
    %c0_i32_1 = arith.constant 0 : i32
    return %c0_i32, %c0_i32_0 : i32, i32
  }
  func.func @transform_4(%arg0: i32, %arg1: i32) -> (i32, i32) {
    %c0_i32 = arith.constant 0 : i32
    %c0_i32_0 = arith.constant 0 : i32
    %c0_i32_1 = arith.constant 0 : i32
    return %c0_i32, %c0_i32_0 : i32, i32
  }
  func.func @transform_5(%arg0: i32, %arg1: i32) -> (i32, i32) {
    %c0_i32 = arith.constant 0 : i32
    %c0_i32_0 = arith.constant 0 : i32
    %c0_i32_1 = arith.constant 0 : i32
    return %c0_i32, %c0_i32_0 : i32, i32
  }
  func.func @transform_6(%arg0: i32, %arg1: i32) -> (i32, i32, i32) {
    %c0_i32 = arith.constant 0 : i32
    %c0_i32_0 = arith.constant 0 : i32
    return %arg0, %arg1, %c0_i32 : i32, i32, i32
  }
}

</mosaic_0001>

<llo_original>
// kernel: tpu_custom_call.1
$region0: #{tpu_custom_call.1}
  #allocation0 [shape = 'u32[]', space=smem, size = 0x4, offset = 0x4, fixed_abs, tag = 'smem constant byte address 0x4 - core index']
  #allocation1 [shape = 'u32[144,128]{1,0:T(1,128)}', space=vmem, size = 0x12000, scoped, tag = 'internal scratch']
  #allocation2 [shape = 'f32[2,8,128]{2,1,0:T(8,128)}', space=vmem, size = 0x2000, scoped, tag = 'scratch operand']
  #allocation3 [shape = 'f32[2,8,32]{2,1,0:T(8,128)}', space=vmem, size = 0x2000, scoped, tag = 'scratch operand']
  %s0 = inlined_call_operand.vmem [shape: f32[2,8,128], index: 0, kind: input, shape index: {}]
  %s1 = inlined_call_operand.vmem [shape: f32[2,8,128], index: 1, kind: input, shape index: {}]
  %s2 = inlined_call_operand.vmem [shape: f32[128,128], index: 2, kind: input, shape index: {}]
  %s3 = inlined_call_operand.vmem [shape: f32[1,128], index: 3, kind: input, shape index: {}]
  %s4 = inlined_call_operand.vmem [shape: f32[128,160], index: 4, kind: input, shape index: {}]
  %s5 = inlined_call_operand.vmem [shape: f32[1,160], index: 5, kind: input, shape index: {}]
  %s6 = inlined_call_operand.hbm [shape: f32[2,8,32], index: 6, kind: output, shape index: {}]
  %s7 = sld [smem:[#allocation0]]
  $region38: #{tpu_custom_call.1} parent=0
    _
  %s9 = ssub.s32 1, %s7
  %s10 = scalar_select 0, %s9, %s7
  $region1: #{tpu_custom_call.1} parent=0
    #allocation4 [shape = 'u8[8192]{0}', space=vmem, size = 0x2000, scoped, tag = 'output window, operand 0, single buffered']
    #allocation5 [shape = 's32[1]{0}', space=sflag, size = 0x4, scoped, tag = 'scoped memory for tpu_custom_call.1']
    %11 = vsyncpa [#allocation5], 0
    // Predicated region
    $region2: #{tpu_custom_call.1} parent=1 // pred_check
      _
    $region3: #{tpu_custom_call.1} parent=1 // pred_check_branch
      %13 = sbr.rel (0) target = $region5
    $region4: #{tpu_custom_call.1} parent=1 // pred_region
      _
    $region5: #{tpu_custom_call.1} parent=1 // pred_fallthru
      _
    // Predicated region
    $region6: #{tpu_custom_call.1} parent=1 // pred_check
      _
    $region7: #{tpu_custom_call.1} parent=1 // pred_check_branch
      %15 = sbr.rel (0) target = $region9
    $region8: #{tpu_custom_call.1} parent=1 // pred_region
      _
    $region9: #{tpu_custom_call.1} parent=1 // pred_fallthru
      _
    // Predicated region
    $region10: #{tpu_custom_call.1} parent=1 // pred_check
      _
    $region11: #{tpu_custom_call.1} parent=1 // pred_check_branch
      %17 = sbr.rel (0) target = $region13
    $region12: #{tpu_custom_call.1} parent=1 // pred_region
      _
    $region13: #{tpu_custom_call.1} parent=1 // pred_fallthru
      _
    // Predicated region
    $region14: #{tpu_custom_call.1} parent=1 // pred_check
      _
    $region15: #{tpu_custom_call.1} parent=1 // pred_check_branch
      %19 = sbr.rel (0) target = $region17
    $region16: #{tpu_custom_call.1} parent=1 // pred_region
      _
    $region17: #{tpu_custom_call.1} parent=1 // pred_fallthru
      _
    // Predicated region
    $region18: #{tpu_custom_call.1} parent=1 // pred_check
      _
    $region19: #{tpu_custom_call.1} parent=1 // pred_check_branch
      %21 = sbr.rel (0) target = $region21
    $region20: #{tpu_custom_call.1} parent=1 // pred_region
      _
    $region21: #{tpu_custom_call.1} parent=1 // pred_fallthru
      _
    // Predicated region
    $region22: #{tpu_custom_call.1} parent=1 // pred_check
      _
    $region23: #{tpu_custom_call.1} parent=1 // pred_check_branch
      %23 = sbr.rel (0) target = $region25
    $region24: #{tpu_custom_call.1} parent=1 // pred_region
      _
    $region25: #{tpu_custom_call.1} parent=1 // pred_fallthru
      _
    %p24 = scmp.eq.s32.totalorder 0, 0
    // Predicated region
    $region26: #{tpu_custom_call.1} parent=1 // pred_check
      %p25 = pneg %p24
    $region27: #{tpu_custom_call.1} parent=1 // pred_check_branch
      %27 = sbr.rel (%p25) target = $region29
    $region28: #{tpu_custom_call.1} parent=1 // pred_region
      %v28 = vld [vmem:[%s1] sm:$0xff]
      %v29 = vld [vmem:[%s1 + $0x8] sm:$0xff]
      %v30 = vld [vmem:[%s4] sm:$0xff]
      %v31 = vld [vmem:[%s4 + $0x8] sm:$0xff]
      %v32 = vld [vmem:[%s4 + $0x10] sm:$0xff]
      %v33 = vld [vmem:[%s4 + $0x18] sm:$0xff]
      %v34 = vld [vmem:[%s4 + $0x20] sm:$0xff]
      %v35 = vld [vmem:[%s4 + $0x28] sm:$0xff]
      %v36 = vld [vmem:[%s4 + $0x30] sm:$0xff]
      %v37 = vld [vmem:[%s4 + $0x38] sm:$0xff]
      %v38 = vld [vmem:[%s4 + $0x40] sm:$0xff]
      %v39 = vld [vmem:[%s4 + $0x48] sm:$0xff]
      %v40 = vld [vmem:[%s4 + $0x50] sm:$0xff]
      %v41 = vld [vmem:[%s4 + $0x58] sm:$0xff]
      %v42 = vld [vmem:[%s4 + $0x60] sm:$0xff]
      %v43 = vld [vmem:[%s4 + $0x68] sm:$0xff]
      %v44 = vld [vmem:[%s4 + $0x70] sm:$0xff]
      %v45 = vld [vmem:[%s4 + $0x78] sm:$0xff]
      %v46 = vld [vmem:[%s4 + $0x80] sm:$0xff]
      %v47 = vld [vmem:[%s4 + $0x88] sm:$0xff]
      %v48 = vld [vmem:[%s4 + $0x90] sm:$0xff]
      %v49 = vld [vmem:[%s4 + $0x98] sm:$0xff]
      %v50 = vld [vmem:[%s4 + $0xa0] sm:$0xff]
      %v51 = vld [vmem:[%s4 + $0xa8] sm:$0xff]
      %v52 = vld [vmem:[%s4 + $0xb0] sm:$0xff]
      %v53 = vld [vmem:[%s4 + $0xb8] sm:$0xff]
      %v54 = vld [vmem:[%s4 + $0xc0] sm:$0xff]
      %v55 = vld [vmem:[%s4 + $0xc8] sm:$0xff]
      %v56 = vld [vmem:[%s4 + $0xd0] sm:$0xff]
      %v57 = vld [vmem:[%s4 + $0xd8] sm:$0xff]
      %v58 = vld [vmem:[%s4 + $0xe0] sm:$0xff]
      %v59 = vld [vmem:[%s4 + $0xe8] sm:$0xff]
      %v60 = vld [vmem:[%s4 + $0xf0] sm:$0xff]
      %v61 = vld [vmem:[%s4 + $0xf8] sm:$0xff]
      %v62 = vld [vmem:[%s5] sm:$0x3]
      %v64 = vlaneseq
      %v65 = vshrl.u32 %v64, 7
      %v66 = vsub.s32 0, %v65
      %v67 = vrot.slane %v62, %v66
      %v68 = vlaneseq
      %v69 = vshrl.u32 %v68, 7
      %v70 = vsub.s32 1, %v69
      %v71 = vrot.slane %v62, %v70
      %74 = vmatprep.subr.mxu0 %v31
      %75 = vmatpush1.msra.mxu0 %v30
      %76 = vmatprep.subr.mxu0 %v33
      %77 = vmatpush1.msra.mxu0 %v32
      %78 = vmatprep.subr.mxu0 %v35
      %79 = vmatpush1.msra.mxu0 %v34
      %80 = vmatprep.subr.mxu0 %v37
      %81 = vmatpush1.msra.mxu0 %v36
      %82 = vmatprep.subr.mxu0 %v39
      %83 = vmatpush1.msra.mxu0 %v38
      %84 = vmatprep.subr.mxu0 %v41
      %85 = vmatpush1.msra.mxu0 %v40
      %86 = vmatprep.subr.mxu0 %v43
      %87 = vmatpush1.msra.mxu0 %v42
      %88 = vmatprep.subr.mxu0 %v45
      %89 = vmatpush1.msra.mxu0 %v44
      %90 = vmatprep.subr.mxu0 %v47
      %91 = vmatpush1.msra.mxu0 %v46
      %92 = vmatprep.subr.mxu0 %v49
      %93 = vmatpush1.msra.mxu0 %v48
      %94 = vmatprep.subr.mxu0 %v51
      %95 = vmatpush1.msra.mxu0 %v50
      %96 = vmatprep.subr.mxu0 %v53
      %97 = vmatpush1.msra.mxu0 %v52
      %98 = vmatprep.subr.mxu0 %v55
      %99 = vmatpush1.msra.mxu0 %v54
      %100 = vmatprep.subr.mxu0 %v57
      %101 = vmatpush1.msra.mxu0 %v56
      %102 = vmatprep.subr.mxu0 %v59
      %103 = vmatpush1.msra.mxu0 %v58
      %104 = vmatprep.subr.mxu0 %v61
      %105 = vmatpush1.msra.mxu0 %v60
      %106 = vmatprep.subr.mxu0 0.0
      %107 = vmatpush1.msra.mxu0 0.0
      %108 = vmatprep.subr.mxu0 0.0
      %109 = vmatpush1.msra.mxu0 0.0
      %110 = vmatprep.subr.mxu0 0.0
      %111 = vmatpush1.msra.mxu0 0.0
      %112 = vmatprep.subr.mxu0 0.0
      %113 = vmatpush1.msra.mxu0 0.0
      %114 = vmatprep.subr.mxu0 0.0
      %115 = vmatpush1.msra.mxu0 0.0
      %116 = vmatprep.subr.mxu0 0.0
      %117 = vmatpush1.msra.mxu0 0.0
      %118 = vmatprep.subr.mxu0 0.0
      %119 = vmatpush1.msra.mxu0 0.0
      %120 = vmatprep.subr.mxu0 0.0
      %121 = vmatpush1.msra.mxu0 0.0
      %122 = vmatprep.subr.mxu0 0.0
      %123 = vmatpush1.msra.mxu0 0.0
      %124 = vmatprep.subr.mxu0 0.0
      %125 = vmatpush1.msra.mxu0 0.0
      %126 = vmatprep.subr.mxu0 0.0
      %127 = vmatpush1.msra.mxu0 0.0
      %128 = vmatprep.subr.mxu0 0.0
      %129 = vmatpush1.msra.mxu0 0.0
      %130 = vmatprep.subr.mxu0 0.0
      %131 = vmatpush1.msra.mxu0 0.0
      %132 = vmatprep.subr.mxu0 0.0
      %133 = vmatpush1.msra.mxu0 0.0
      %134 = vmatprep.subr.mxu0 0.0
      %135 = vmatpush1.msra.mxu0 0.0
      %136 = vmatprep.subr.mxu0 0.0
      %137 = vmatpush1.msra.mxu0 0.0
      %138 = vmatprep.mubr.f32.mxu0 0.0
      %139 = vmatmul.mubr.f32.gmra.mrb[0].mxu0 %v28
      %v140 = vpop.f32.mrb[0].mxu0
      %v141 = vadd.f32 %v67, %v140
      %v142 = vpop.f32.mrb[0].mxu0
      %v143 = vadd.f32 %v71, %v142
      %144 = vmatprep.mubr.f32.mxu0 0.0
      %145 = vmatmul.mubr.f32.gmra.mrb[0].mxu0 %v29
      %v146 = vpop.f32.mrb[0].mxu0
      %v147 = vadd.f32 %v67, %v146
      %v148 = vpop.f32.mrb[0].mxu0
      %v149 = vadd.f32 %v71, %v148
      %150 = vdwg.mxu0
      %151 = vst [vmem:[#allocation2] sm:$0xff] %v141
      %152 = vst [vmem:[#allocation2 + $0x8] sm:$0xff] %v147
      %vm153 = vcmask 261120
      %154 = vst.msk [vmem:[#allocation3] sm:$0xff] %vm153, %v143
      %155 = vst.msk [vmem:[#allocation3 + $0x8] sm:$0xff] %vm153, %v149
    $region29: #{tpu_custom_call.1} parent=1 // pred_fallthru
      _
    %v156 = vld [vmem:[%s0] sm:$0xff]
    %v157 = vld [vmem:[%s0 + $0x8] sm:$0xff]
    %v158 = vld [vmem:[%s2] sm:$0xff]
    %v159 = vld [vmem:[%s2 + $0x8] sm:$0xff]
    %v160 = vld [vmem:[%s2 + $0x10] sm:$0xff]
    %v161 = vld [vmem:[%s2 + $0x18] sm:$0xff]
    %v162 = vld [vmem:[%s2 + $0x20] sm:$0xff]
    %v163 = vld [vmem:[%s2 + $0x28] sm:$0xff]
    %v164 = vld [vmem:[%s2 + $0x30] sm:$0xff]
    %v165 = vld [vmem:[%s2 + $0x38] sm:$0xff]
    %v166 = vld [vmem:[%s2 + $0x40] sm:$0xff]
    %v167 = vld [vmem:[%s2 + $0x48] sm:$0xff]
    %v168 = vld [vmem:[%s2 + $0x50] sm:$0xff]
    %v169 = vld [vmem:[%s2 + $0x58] sm:$0xff]
    %v170 = vld [vmem:[%s2 + $0x60] sm:$0xff]
    %v171 = vld [vmem:[%s2 + $0x68] sm:$0xff]
    %v172 = vld [vmem:[%s2 + $0x70] sm:$0xff]
    %v173 = vld [vmem:[%s2 + $0x78] sm:$0xff]
    %v174 = vld [vmem:[%s3] sm:$0x1]
    %v176 = vlaneseq
    %v177 = vshrl.u32 %v176, 7
    %v178 = vsub.s32 0, %v177
    %v179 = vrot.slane %v174, %v178
    %181 = vmatprep.subr.mxu0 0.0
    %182 = vmatpush1.msra.mxu0 %v158
    %183 = vmatprep.subr.mxu0 0.0
    %184 = vmatpush1.msra.mxu0 %v159
    %185 = vmatprep.subr.mxu0 0.0
    %186 = vmatpush1.msra.mxu0 %v160
    %187 = vmatprep.subr.mxu0 0.0
    %188 = vmatpush1.msra.mxu0 %v161
    %189 = vmatprep.subr.mxu0 0.0
    %190 = vmatpush1.msra.mxu0 %v162
    %191 = vmatprep.subr.mxu0 0.0
    %192 = vmatpush1.msra.mxu0 %v163
    %193 = vmatprep.subr.mxu0 0.0
    %194 = vmatpush1.msra.mxu0 %v164
    %195 = vmatprep.subr.mxu0 0.0
    %196 = vmatpush1.msra.mxu0 %v165
    %197 = vmatprep.subr.mxu0 0.0
    %198 = vmatpush1.msra.mxu0 %v166
    %199 = vmatprep.subr.mxu0 0.0
    %200 = vmatpush1.msra.mxu0 %v167
    %201 = vmatprep.subr.mxu0 0.0
    %202 = vmatpush1.msra.mxu0 %v168
    %203 = vmatprep.subr.mxu0 0.0
    %204 = vmatpush1.msra.mxu0 %v169
    %205 = vmatprep.subr.mxu0 0.0
    %206 = vmatpush1.msra.mxu0 %v170
    %207 = vmatprep.subr.mxu0 0.0
    %208 = vmatpush1.msra.mxu0 %v171
    %209 = vmatprep.subr.mxu0 0.0
    %210 = vmatpush1.msra.mxu0 %v172
    %211 = vmatprep.subr.mxu0 0.0
    %212 = vmatpush1.msra.mxu0 %v173
    %213 = vmatprep.subr.mxu0 0.0
    %214 = vmatpush1.msra.mxu0 0.0
    %215 = vmatprep.subr.mxu0 0.0
    %216 = vmatpush1.msra.mxu0 0.0
    %217 = vmatprep.subr.mxu0 0.0
    %218 = vmatpush1.msra.mxu0 0.0
    %219 = vmatprep.subr.mxu0 0.0
    %220 = vmatpush1.msra.mxu0 0.0
    %221 = vmatprep.subr.mxu0 0.0
    %222 = vmatpush1.msra.mxu0 0.0
    %223 = vmatprep.subr.mxu0 0.0
    %224 = vmatpush1.msra.mxu0 0.0
    %225 = vmatprep.subr.mxu0 0.0
    %226 = vmatpush1.msra.mxu0 0.0
    %227 = vmatprep.subr.mxu0 0.0
    %228 = vmatpush1.msra.mxu0 0.0
    %229 = vmatprep.subr.mxu0 0.0
    %230 = vmatpush1.msra.mxu0 0.0
    %231 = vmatprep.subr.mxu0 0.0
    %232 = vmatpush1.msra.mxu0 0.0
    %233 = vmatprep.subr.mxu0 0.0
    %234 = vmatpush1.msra.mxu0 0.0
    %235 = vmatprep.subr.mxu0 0.0
    %236 = vmatpush1.msra.mxu0 0.0
    %237 = vmatprep.subr.mxu0 0.0
    %238 = vmatpush1.msra.mxu0 0.0
    %239 = vmatprep.subr.mxu0 0.0
    %240 = vmatpush1.msra.mxu0 0.0
    %241 = vmatprep.subr.mxu0 0.0
    %242 = vmatpush1.msra.mxu0 0.0
    %243 = vmatprep.subr.mxu0 0.0
    %244 = vmatpush1.msra.mxu0 0.0
    %245 = vmatprep.mubr.f32.mxu0 0.0
    %246 = vmatmul.mubr.f32.gmra.mrb[0].mxu0 %v156
    %v247 = vpop.f32.mrb[0].mxu0
    %v248 = vadd.f32 %v179, %v247
    %v249 = vpop.f32.mrb[0].mxu0
    %250 = vmatprep.mubr.f32.mxu0 0.0
    %251 = vmatmul.mubr.f32.gmra.mrb[0].mxu0 %v157
    %v252 = vpop.f32.mrb[0].mxu0
    %v253 = vadd.f32 %v179, %v252
    %v254 = vpop.f32.mrb[0].mxu0
    %255 = vdwg.mxu0
    %v256 = vld [vmem:[#allocation2] sm:$0xff]
    %v257 = vld [vmem:[#allocation2 + $0x8] sm:$0xff]
    %258 = vmatprep.subr.mxu0 0.0
    %259 = vmatpush1.xpose.msra.mxu0 %v256
    %260 = vmatprep.subr.mxu0 0.0
    %261 = vmatpush1.xpose.msra.mxu0 0.0
    %262 = vmatprep.subr.mxu0 0.0
    %263 = vmatpush1.xpose.msra.mxu0 0.0
    %264 = vmatprep.subr.mxu0 0.0
    %265 = vmatpush1.xpose.msra.mxu0 0.0
    %266 = vmatprep.subr.mxu0 0.0
    %267 = vmatpush1.xpose.msra.mxu0 0.0
    %268 = vmatprep.subr.mxu0 0.0
    %269 = vmatpush1.xpose.msra.mxu0 0.0
    %270 = vmatprep.subr.mxu0 0.0
    %271 = vmatpush1.xpose.msra.mxu0 0.0
    %272 = vmatprep.subr.mxu0 0.0
    %273 = vmatpush1.xpose.msra.mxu0 0.0
    %274 = vmatprep.subr.mxu0 0.0
    %275 = vmatpush1.xpose.msra.mxu0 0.0
    %276 = vmatprep.subr.mxu0 0.0
    %277 = vmatpush1.xpose.msra.mxu0 0.0
    %278 = vmatprep.subr.mxu0 0.0
    %279 = vmatpush1.xpose.msra.mxu0 0.0
    %280 = vmatprep.subr.mxu0 0.0
    %281 = vmatpush1.xpose.msra.mxu0 0.0
    %282 = vmatprep.subr.mxu0 0.0
    %283 = vmatpush1.xpose.msra.mxu0 0.0
    %284 = vmatprep.subr.mxu0 0.0
    %285 = vmatpush1.xpose.msra.mxu0 0.0
    %286 = vmatprep.subr.mxu0 0.0
    %287 = vmatpush1.xpose.msra.mxu0 0.0
    %288 = vmatprep.subr.mxu0 0.0
    %289 = vmatpush1.xpose.msra.mxu0 0.0
    %290 = vmatprep.subr.mxu0 0.0
    %291 = vmatpush1.xpose.msra.mxu0 0.0
    %292 = vmatprep.subr.mxu0 0.0
    %293 = vmatpush1.xpose.msra.mxu0 0.0
    %294 = vmatprep.subr.mxu0 0.0
    %295 = vmatpush1.xpose.msra.mxu0 0.0
    %296 = vmatprep.subr.mxu0 0.0
    %297 = vmatpush1.xpose.msra.mxu0 0.0
    %298 = vmatprep.subr.mxu0 0.0
    %299 = vmatpush1.xpose.msra.mxu0 0.0
    %300 = vmatprep.subr.mxu0 0.0
    %301 = vmatpush1.xpose.msra.mxu0 0.0
    %302 = vmatprep.subr.mxu0 0.0
    %303 = vmatpush1.xpose.msra.mxu0 0.0
    %304 = vmatprep.subr.mxu0 0.0
    %305 = vmatpush1.xpose.msra.mxu0 0.0
    %306 = vmatprep.subr.mxu0 0.0
    %307 = vmatpush1.xpose.msra.mxu0 0.0
    %308 = vmatprep.subr.mxu0 0.0
    %309 = vmatpush1.xpose.msra.mxu0 0.0
    %310 = vmatprep.subr.mxu0 0.0
    %311 = vmatpush1.xpose.msra.mxu0 0.0
    %312 = vmatprep.subr.mxu0 0.0
    %313 = vmatpush1.xpose.msra.mxu0 0.0
    %314 = vmatprep.subr.mxu0 0.0
    %315 = vmatpush1.xpose.msra.mxu0 0.0
    %316 = vmatprep.subr.mxu0 0.0
    %317 = vmatpush1.xpose.msra.mxu0 0.0
    %318 = vmatprep.subr.mxu0 0.0
    %319 = vmatpush1.xpose.msra.mxu0 0.0
    %320 = vmatprep.subr.mxu0 0.0
    %321 = vmatpush1.xpose.msra.mxu0 0.0
    %322 = vmatprep.mubr.f32.mxu0 0.0
    %323 = vmatmul.mubr.f32.gmra.mrb[0].mxu0 %v248
    %v324 = vpop.f32.mrb[0].mxu0
    %v325 = vadd.f32 0.0, %v324
    %v326 = vpop.f32.mrb[0].mxu0
    %327 = vdwg.mxu0
    %328 = vmatprep.subr.mxu0 0.0
    %329 = vmatpush1.xpose.msra.mxu0 %v257
    %330 = vmatprep.subr.mxu0 0.0
    %331 = vmatpush1.xpose.msra.mxu0 0.0
    %332 = vmatprep.subr.mxu0 0.0
    %333 = vmatpush1.xpose.msra.mxu0 0.0
    %334 = vmatprep.subr.mxu0 0.0
    %335 = vmatpush1.xpose.msra.mxu0 0.0
    %336 = vmatprep.subr.mxu0 0.0
    %337 = vmatpush1.xpose.msra.mxu0 0.0
    %338 = vmatprep.subr.mxu0 0.0
    %339 = vmatpush1.xpose.msra.mxu0 0.0
    %340 = vmatprep.subr.mxu0 0.0
    %341 = vmatpush1.xpose.msra.mxu0 0.0
    %342 = vmatprep.subr.mxu0 0.0
    %343 = vmatpush1.xpose.msra.mxu0 0.0
    %344 = vmatprep.subr.mxu0 0.0
    %345 = vmatpush1.xpose.msra.mxu0 0.0
    %346 = vmatprep.subr.mxu0 0.0
    %347 = vmatpush1.xpose.msra.mxu0 0.0
    %348 = vmatprep.subr.mxu0 0.0
    %349 = vmatpush1.xpose.msra.mxu0 0.0
    %350 = vmatprep.subr.mxu0 0.0
    %351 = vmatpush1.xpose.msra.mxu0 0.0
    %352 = vmatprep.subr.mxu0 0.0
    %353 = vmatpush1.xpose.msra.mxu0 0.0
    %354 = vmatprep.subr.mxu0 0.0
    %355 = vmatpush1.xpose.msra.mxu0 0.0
    %356 = vmatprep.subr.mxu0 0.0
    %357 = vmatpush1.xpose.msra.mxu0 0.0
    %358 = vmatprep.subr.mxu0 0.0
    %359 = vmatpush1.xpose.msra.mxu0 0.0
    %360 = vmatprep.subr.mxu0 0.0
    %361 = vmatpush1.xpose.msra.mxu0 0.0
    %362 = vmatprep.subr.mxu0 0.0
    %363 = vmatpush1.xpose.msra.mxu0 0.0
    %364 = vmatprep.subr.mxu0 0.0
    %365 = vmatpush1.xpose.msra.mxu0 0.0
    %366 = vmatprep.subr.mxu0 0.0
    %367 = vmatpush1.xpose.msra.mxu0 0.0
    %368 = vmatprep.subr.mxu0 0.0
    %369 = vmatpush1.xpose.msra.mxu0 0.0
    %370 = vmatprep.subr.mxu0 0.0
    %371 = vmatpush1.xpose.msra.mxu0 0.0
    %372 = vmatprep.subr.mxu0 0.0
    %373 = vmatpush1.xpose.msra.mxu0 0.0
    %374 = vmatprep.subr.mxu0 0.0
    %375 = vmatpush1.xpose.msra.mxu0 0.0
    %376 = vmatprep.subr.mxu0 0.0
    %377 = vmatpush1.xpose.msra.mxu0 0.0
    %378 = vmatprep.subr.mxu0 0.0
    %379 = vmatpush1.xpose.msra.mxu0 0.0
    %380 = vmatprep.subr.mxu0 0.0
    %381 = vmatpush1.xpose.msra.mxu0 0.0
    %382 = vmatprep.subr.mxu0 0.0
    %383 = vmatpush1.xpose.msra.mxu0 0.0
    %384 = vmatprep.subr.mxu0 0.0
    %385 = vmatpush1.xpose.msra.mxu0 0.0
    %386 = vmatprep.subr.mxu0 0.0
    %387 = vmatpush1.xpose.msra.mxu0 0.0
    %388 = vmatprep.subr.mxu0 0.0
    %389 = vmatpush1.xpose.msra.mxu0 0.0
    %390 = vmatprep.subr.mxu0 0.0
    %391 = vmatpush1.xpose.msra.mxu0 0.0
    %392 = vmatprep.mubr.f32.mxu0 0.0
    %393 = vmatmul.mubr.f32.gmra.mrb[0].mxu0 %v253
    %v394 = vpop.f32.mrb[0].mxu0
    %v395 = vadd.f32 0.0, %v394
    %v396 = vpop.f32.mrb[0].mxu0
    %397 = vdwg.mxu0
    %vm398 = vcmask 64512
    %v399 = vsel %vm398, %v325, -inf
    %400 = vmax.xlane.f32.xlu0 %v399
    %v401 = vpop.xlane.xlu0 %400
    %v402 = vsel %vm398, %v395, -inf
    %403 = vmax.xlane.f32.xlu0 %v402
    %v404 = vpop.xlane.xlu0 %403
    %v405 = vsub.f32 %v325, %v401
    %v406 = vsub.f32 %v395, %v404
    %v407 = vmul.f32 %v405, 1.442695
    %v408 = vpow.pop %v407
    %v409 = vmul.f32 %v406, 1.442695
    %v410 = vpow.pop %v409
    %v411 = vsel %vm398, %v408, 0.0
    %412 = vadd.xlane.f32.xlu0 %v411
    %v413 = vpop.xlane.xlu0 %412
    %v414 = vsel %vm398, %v410, 0.0
    %415 = vadd.xlane.f32.xlu0 %v414
    %v416 = vpop.xlane.xlu0 %415
    %v417 = vrcp.pop %v413
    %v418 = vmul.f32 %v408, %v417
    %v419 = vrcp.pop %v416
    %v420 = vmul.f32 %v410, %v419
    %v421 = vld [vmem:[#allocation3] sm:$0xff]
    %v422 = vld [vmem:[#allocation3 + $0x8] sm:$0xff]
    %v424 = vsel %vm398, %v418, 0
    %426 = vmatprep.subr.mxu0 0.0
    %427 = vmatpush1.msra.mxu0 %v421
    %428 = vmatprep.subr.mxu0 0.0
    %429 = vmatpush1.msra.mxu0 0.0
    %430 = vmatprep.subr.mxu0 0.0
    %431 = vmatpush1.msra.mxu0 0.0
    %432 = vmatprep.subr.mxu0 0.0
    %433 = vmatpush1.msra.mxu0 0.0
    %434 = vmatprep.subr.mxu0 0.0
    %435 = vmatpush1.msra.mxu0 0.0
    %436 = vmatprep.subr.mxu0 0.0
    %437 = vmatpush1.msra.mxu0 0.0
    %438 = vmatprep.subr.mxu0 0.0
    %439 = vmatpush1.msra.mxu0 0.0
    %440 = vmatprep.subr.mxu0 0.0
    %441 = vmatpush1.msra.mxu0 0.0
    %442 = vmatprep.subr.mxu0 0.0
    %443 = vmatpush1.msra.mxu0 0.0
    %444 = vmatprep.subr.mxu0 0.0
    %445 = vmatpush1.msra.mxu0 0.0
    %446 = vmatprep.subr.mxu0 0.0
    %447 = vmatpush1.msra.mxu0 0.0
    %448 = vmatprep.subr.mxu0 0.0
    %449 = vmatpush1.msra.mxu0 0.0
    %450 = vmatprep.subr.mxu0 0.0
    %451 = vmatpush1.msra.mxu0 0.0
    %452 = vmatprep.subr.mxu0 0.0
    %453 = vmatpush1.msra.mxu0 0.0
    %454 = vmatprep.subr.mxu0 0.0
    %455 = vmatpush1.msra.mxu0 0.0
    %456 = vmatprep.subr.mxu0 0.0
    %457 = vmatpush1.msra.mxu0 0.0
    %458 = vmatprep.subr.mxu0 0.0
    %459 = vmatpush1.msra.mxu0 0.0
    %460 = vmatprep.subr.mxu0 0.0
    %461 = vmatpush1.msra.mxu0 0.0
    %462 = vmatprep.subr.mxu0 0.0
    %463 = vmatpush1.msra.mxu0 0.0
    %464 = vmatprep.subr.mxu0 0.0
    %465 = vmatpush1.msra.mxu0 0.0
    %466 = vmatprep.subr.mxu0 0.0
    %467 = vmatpush1.msra.mxu0 0.0
    %468 = vmatprep.subr.mxu0 0.0
    %469 = vmatpush1.msra.mxu0 0.0
    %470 = vmatprep.subr.mxu0 0.0
    %471 = vmatpush1.msra.mxu0 0.0
    %472 = vmatprep.subr.mxu0 0.0
    %473 = vmatpush1.msra.mxu0 0.0
    %474 = vmatprep.subr.mxu0 0.0
    %475 = vmatpush1.msra.mxu0 0.0
    %476 = vmatprep.subr.mxu0 0.0
    %477 = vmatpush1.msra.mxu0 0.0
    %478 = vmatprep.subr.mxu0 0.0
    %479 = vmatpush1.msra.mxu0 0.0
    %480 = vmatprep.subr.mxu0 0.0
    %481 = vmatpush1.msra.mxu0 0.0
    %482 = vmatprep.subr.mxu0 0.0
    %483 = vmatpush1.msra.mxu0 0.0
    %484 = vmatprep.subr.mxu0 0.0
    %485 = vmatpush1.msra.mxu0 0.0
    %486 = vmatprep.subr.mxu0 0.0
    %487 = vmatpush1.msra.mxu0 0.0
    %488 = vmatprep.subr.mxu0 0.0
    %489 = vmatpush1.msra.mxu0 0.0
    %490 = vmatprep.mubr.f32.mxu0 0.0
    %491 = vmatmul.mubr.f32.gmra.mrb[0].mxu0 %v424
    %v492 = vpop.f32.mrb[0].mxu0
    %v493 = vadd.f32 0.0, %v492
    %v494 = vpop.f32.mrb[0].mxu0
    %495 = vdwg.mxu0
    %v497 = vsel %vm398, %v420, 0
    %499 = vmatprep.subr.mxu0 0.0
    %500 = vmatpush1.msra.mxu0 %v422
    %501 = vmatprep.subr.mxu0 0.0
    %502 = vmatpush1.msra.mxu0 0.0
    %503 = vmatprep.subr.mxu0 0.0
    %504 = vmatpush1.msra.mxu0 0.0
    %505 = vmatprep.subr.mxu0 0.0
    %506 = vmatpush1.msra.mxu0 0.0
    %507 = vmatprep.subr.mxu0 0.0
    %508 = vmatpush1.msra.mxu0 0.0
    %509 = vmatprep.subr.mxu0 0.0
    %510 = vmatpush1.msra.mxu0 0.0
    %511 = vmatprep.subr.mxu0 0.0
    %512 = vmatpush1.msra.mxu0 0.0
    %513 = vmatprep.subr.mxu0 0.0
    %514 = vmatpush1.msra.mxu0 0.0
    %515 = vmatprep.subr.mxu0 0.0
    %516 = vmatpush1.msra.mxu0 0.0
    %517 = vmatprep.subr.mxu0 0.0
    %518 = vmatpush1.msra.mxu0 0.0
    %519 = vmatprep.subr.mxu0 0.0
    %520 = vmatpush1.msra.mxu0 0.0
    %521 = vmatprep.subr.mxu0 0.0
    %522 = vmatpush1.msra.mxu0 0.0
    %523 = vmatprep.subr.mxu0 0.0
    %524 = vmatpush1.msra.mxu0 0.0
    %525 = vmatprep.subr.mxu0 0.0
    %526 = vmatpush1.msra.mxu0 0.0
    %527 = vmatprep.subr.mxu0 0.0
    %528 = vmatpush1.msra.mxu0 0.0
    %529 = vmatprep.subr.mxu0 0.0
    %530 = vmatpush1.msra.mxu0 0.0
    %531 = vmatprep.subr.mxu0 0.0
    %532 = vmatpush1.msra.mxu0 0.0
    %533 = vmatprep.subr.mxu0 0.0
    %534 = vmatpush1.msra.mxu0 0.0
    %535 = vmatprep.subr.mxu0 0.0
    %536 = vmatpush1.msra.mxu0 0.0
    %537 = vmatprep.subr.mxu0 0.0
    %538 = vmatpush1.msra.mxu0 0.0
    %539 = vmatprep.subr.mxu0 0.0
    %540 = vmatpush1.msra.mxu0 0.0
    %541 = vmatprep.subr.mxu0 0.0
    %542 = vmatpush1.msra.mxu0 0.0
    %543 = vmatprep.subr.mxu0 0.0
    %544 = vmatpush1.msra.mxu0 0.0
    %545 = vmatprep.subr.mxu0 0.0
    %546 = vmatpush1.msra.mxu0 0.0
    %547 = vmatprep.subr.mxu0 0.0
    %548 = vmatpush1.msra.mxu0 0.0
    %549 = vmatprep.subr.mxu0 0.0
    %550 = vmatpush1.msra.mxu0 0.0
    %551 = vmatprep.subr.mxu0 0.0
    %552 = vmatpush1.msra.mxu0 0.0
    %553 = vmatprep.subr.mxu0 0.0
    %554 = vmatpush1.msra.mxu0 0.0
    %555 = vmatprep.subr.mxu0 0.0
    %556 = vmatpush1.msra.mxu0 0.0
    %557 = vmatprep.subr.mxu0 0.0
    %558 = vmatpush1.msra.mxu0 0.0
    %559 = vmatprep.subr.mxu0 0.0
    %560 = vmatpush1.msra.mxu0 0.0
    %561 = vmatprep.subr.mxu0 0.0
    %562 = vmatpush1.msra.mxu0 0.0
    %563 = vmatprep.mubr.f32.mxu0 0.0
    %564 = vmatmul.mubr.f32.gmra.mrb[0].mxu0 %v497
    %v565 = vpop.f32.mrb[0].mxu0
    %v566 = vadd.f32 0.0, %v565
    %v567 = vpop.f32.mrb[0].mxu0
    %568 = vdwg.mxu0
    %vm569 = vcmask 261120
    %570 = vst.msk [vmem:[#allocation4] sm:$0xff] %vm569, %v493
    %571 = vst.msk [vmem:[#allocation4 + $0x8] sm:$0xff] %vm569, %v566
    // Predicated region
    $region30: #{tpu_custom_call.1} parent=1 // pred_check
      _
    $region31: #{tpu_custom_call.1} parent=1 // pred_check_branch
      %573 = sbr.rel (0) target = $region33
    $region32: #{tpu_custom_call.1} parent=1 // pred_region
      %s575 = ssub.s32 256, 256
      %576 = vsyncadd [#allocation5], %s575
      %s577 = sshll.u32 [#allocation4], 4
      %s578 = int_to_ptr.vmem [resolvable:$true] %s577
      %583 = dma.vmem_to_hbm [thread:$0]  %s578, 256, %s6, [#allocation5], 128, 128, 8
    $region33: #{tpu_custom_call.1} parent=1 // pred_fallthru
      _
    // Predicated region
    $region34: #{tpu_custom_call.1} parent=1 // pred_check
      _
    $region35: #{tpu_custom_call.1} parent=1 // pred_check_branch
      %585 = sbr.rel (0) target = $region37
    $region36: #{tpu_custom_call.1} parent=1 // pred_region
      %586 = dma.done [#allocation5], 256
    $region37: #{tpu_custom_call.1} parent=1 // pred_fallthru
      _
    %587 = vsyncpa [#allocation5], 1

</llo_original>
